<compile_context>
chip_gen: v7x
topology: tpu7x:2x2x1
jax: 0.10.0
libtpu: 0.0.40
codegen_flags: <defaults>
</compile_context>

<pallas_src>
import functools

import jax
import jax.numpy as jnp
from jax.experimental import pallas as pl
from jax.experimental.pallas import tpu as pltpu


def _dropout2d_kernel(scale_ref, x_ref, o_ref):
    """o = x * scale, broadcast over the T-tile.

    scale_ref : VMEM (1, 1, D) float32 -- per-batch flattened channel scale.
    x_ref     : VMEM (1, tT, D)
    o_ref     : VMEM (1, tT, D)
    """
    o_ref[...] = (x_ref[...] * scale_ref[...]).astype(o_ref.dtype)


def _pick_t_tile(T, D, itemsize, target_bytes=2 * 1024 * 1024):
    """Largest T-tile with block size <= ~target_bytes, preferring multiples
    of 8 that divide T (so there are no ragged edge blocks)."""
    max_rows = target_bytes // max(1, D * itemsize)
    if T <= max(8, max_rows):
        return T
    t = max(8, (max_rows // 8) * 8)
    cand = t
    while cand >= 8:
        if T % cand == 0:          # exact divisor -> every block is full
            return cand
        cand -= 8
    return t                        # ragged last block; Pallas masks the edge


@functools.partial(jax.jit, static_argnames=("drop_rate", "training"))
def dropout2d(x, drop_rate, key, training=True):
    """Channel-dropout forward matching SpeechBrain Dropout2d.

    x : (B, T, C1, C2). Whole (b, :, c1, :) slabs are zeroed with prob
    drop_rate; survivors are scaled by 1/(1 - drop_rate).
    """
    B, T, C1, C2 = x.shape
    if (not training) or drop_rate == 0.0:
        return x
    if drop_rate >= 1.0:
        # keep_prob == 0: PyTorch returns all zeros; avoid 0/0 -> NaN.
        return jnp.zeros_like(x)

    keep_prob = 1.0 - drop_rate
    keep = jax.random.bernoulli(key, keep_prob, (B, C1))
    # Inverted-dropout scale; keep in f32 to avoid double-rounding 1/(1-p).
    scale = keep.astype(jnp.float32) / jnp.float32(keep_prob)          # (B, C1)

    D = C1 * C2
    # Per-batch lane vector: each channel's scale repeated C2 times -> (B,1,D).
    scale_vec = jnp.repeat(scale, C2, axis=1).reshape(B, 1, D)
    x_flat = x.reshape(B, T, D)                                        # free

    tT = _pick_t_tile(T, D, x.dtype.itemsize)
    grid = (B, pl.cdiv(T, tT))

    out_flat = pl.pallas_call(
        _dropout2d_kernel,
        out_shape=jax.ShapeDtypeStruct((B, T, D), x.dtype),
        grid_spec=pltpu.PrefetchScalarGridSpec(
            num_scalar_prefetch=0,
            grid=grid,
            in_specs=[
                pl.BlockSpec((1, 1, D), lambda b, t: (b, 0, 0)),    # scale
                pl.BlockSpec((1, tT, D), lambda b, t: (b, t, 0)),   # x
            ],
            out_specs=pl.BlockSpec((1, tT, D), lambda b, t: (b, t, 0)),
        ),
        compiler_params=pltpu.CompilerParams(
            dimension_semantics=("parallel", "parallel")),
    )(scale_vec, x_flat)

    # Back to the module's (B, T, C1, C2) layout (free reshape).
    return out_flat.reshape(B, T, C1, C2)


if __name__ == "__main__":
    # Small shapes consistent with the module's 4-D input convention.
    # D = C1*C2 = 128 -> lane-dense, unmasked output stores.
    B, T, C1, C2 = 2, 16, 4, 32
    drop_rate = 0.5

    key = jax.random.PRNGKey(0)
    k_data, k_mask = jax.random.split(key)
    x = jax.random.normal(k_data, (B, T, C1, C2), dtype=jnp.float32)

    y = dropout2d(x, drop_rate, k_mask, training=True)
    y = jax.block_until_ready(y)

    # Reference check: each (b, :, c1, :) slab is either all zeros or x/(1-p).
    keep = jax.random.bernoulli(k_mask, 1.0 - drop_rate, (B, C1))
    scale = keep.astype(jnp.float32) / (1.0 - drop_rate)
    y_ref = x * scale[:, None, :, None]
    assert y.shape == x.shape
    assert jnp.allclose(y, y_ref, atol=1e-6), "mismatch vs. reference"

    # Edge cases: eval mode is identity; drop_rate=1.0 is all zeros (no NaNs).
    y_eval = jax.block_until_ready(dropout2d(x, drop_rate, k_mask, training=False))
    assert jnp.array_equal(y_eval, x)
    y_all = jax.block_until_ready(dropout2d(x, 1.0, k_mask, training=True))
    assert jnp.all(y_all == 0)

    print("KERNEL_OK")
</pallas_src>

<mosaic_0001>
module attributes {stable_mosaic.version = 11 : i64} {
  func.func @_dropout2d_kernel(%arg0: i32, %arg1: i32, %arg2: memref<1x1x128xf32, #tpu.memory_space<vmem>>, %arg3: memref<1x16x128xf32, #tpu.memory_space<vmem>>, %arg4: memref<1x16x128xf32, #tpu.memory_space<vmem>>) attributes {dimension_semantics = [#tpu.dimension_semantics<parallel>, #tpu.dimension_semantics<parallel>], iteration_bounds = array<i64: 2, 1>, scalar_prefetch = 0 : i64, scratch_operands = 0 : i64, tpu.core_type = #tpu.core_type<tc>, window_params = [{transform_indices = @transform_0, window_bounds = array<i64: 1, 1, 128>}, {transform_indices = @transform_1, window_bounds = array<i64: 1, 16, 128>}, {transform_indices = @transform_2, window_bounds = array<i64: 1, 16, 128>}]} {
    %c0 = arith.constant 0 : index
    %c0_0 = arith.constant 0 : index
    %c0_1 = arith.constant 0 : index
    %0 = vector.load %arg3[%c0, %c0_0, %c0_1] : memref<1x16x128xf32, #tpu.memory_space<vmem>>, vector<1x16x128xf32>
    %c0_2 = arith.constant 0 : index
    %c0_3 = arith.constant 0 : index
    %c0_4 = arith.constant 0 : index
    %1 = vector.load %arg2[%c0_2, %c0_3, %c0_4] : memref<1x1x128xf32, #tpu.memory_space<vmem>>, vector<1x1x128xf32>
    %2 = vector.broadcast %1 : vector<1x1x128xf32> to vector<1x16x128xf32>
    %3 = arith.mulf %0, %2 : vector<1x16x128xf32>
    %c0_5 = arith.constant 0 : index
    %c0_6 = arith.constant 0 : index
    %c0_7 = arith.constant 0 : index
    %4 = vector.load %arg4[%c0_5, %c0_6, %c0_7] : memref<1x16x128xf32, #tpu.memory_space<vmem>>, vector<1x16x128xf32>
    tpu.vector_store %arg4[%c0_5, %c0_6, %c0_7], %3 {strides = array<i32>} : memref<1x16x128xf32, #tpu.memory_space<vmem>>, vector<1x16x128xf32>,
    return
  }
  func.func @transform_0(%arg0: i32, %arg1: i32) -> (i32, i32, i32) {
    %c0_i32 = arith.constant 0 : i32
    %c0_i32_0 = arith.constant 0 : i32
    %c0_i32_1 = arith.constant 0 : i32
    return %arg0, %c0_i32, %c0_i32_0 : i32, i32, i32
  }
  func.func @transform_1(%arg0: i32, %arg1: i32) -> (i32, i32, i32) {
    %c0_i32 = arith.constant 0 : i32
    %c0_i32_0 = arith.constant 0 : i32
    return %arg0, %arg1, %c0_i32 : i32, i32, i32
  }
  func.func @transform_2(%arg0: i32, %arg1: i32) -> (i32, i32, i32) {
    %c0_i32 = arith.constant 0 : i32
    %c0_i32_0 = arith.constant 0 : i32
    return %arg0, %arg1, %c0_i32 : i32, i32, i32
  }
}

</mosaic_0001>

<llo_original>
// kernel: dropout2d.1
$region0: #{dropout2d.1}
  #allocation0 [shape = 'u32[]', space=smem, size = 0x4, offset = 0x4, fixed_abs, tag = 'smem constant byte address 0x4 - core index']
  #allocation1 [shape = 'u32[144,128]{1,0:T(1,128)}', space=vmem, size = 0x12000, scoped, tag = 'internal scratch']
  %s0 = inlined_call_operand.vmem [shape: f32[2,1,128], index: 0, kind: input, shape index: {}]
  %s1 = inlined_call_operand.vmem [shape: f32[2,16,128], index: 1, kind: input, shape index: {}]
  %s2 = inlined_call_operand.vmem [shape: f32[2,16,128], index: 2, kind: output, shape index: {}]
  %s3 = sld [smem:[#allocation0]]
  $region41: #{dropout2d.1} parent=0
    _
  %s5 = ssub.s32 1, %s3
  %s6 = scalar_select 0, %s5, %s3
  loop: start=0, step=1, limit=4
  $region2: #{dropout2d.1} parent=0 // loop_pre_header
    _
  $region3: #{dropout2d.1} parent=0 // loop_header
    %s8 = sphi 0, %s12
    %p9 = scmp.ge.s32.totalorder %s8, 4
    %s15 = sphi 0, %s27
    %s16 = sphi 0, %s23
    %s17 = sphi 0, %s15
    %s18 = sphi 0, %s16
    %s19 = sphi 0, %s17
    %s20 = sphi 0, %s18
    %s30 = sphi 0, %s32
    %s33 = sphi 0, %s30
    %s34 = sphi 0, %s33
    %s50 = sphi 0, %s34
    %s58 = sphi 0, %s60
    %s61 = sphi 0, %s58
    %s62 = sphi 0, %s61
    %s78 = sphi 0, %s62
    %s86 = sphi 0, %s88
    %s89 = sphi 0, %s86
    %s90 = sphi 0, %s89
    %s106 = sphi 0, %s90
  $region4: #{dropout2d.1} parent=0 // loop_header_branch
    %11 = sbr.rel (%p9) target = $region8
  $region5: #{dropout2d.1} parent=0 // loop_body
    %s13 = ssub.s32 %s8, 1
    %s14 = ssub.s32 %s8, 2
    %s21 = sadd.s32 1, %s16
    %p22 = scmp.ge.s32.totalorder %s21, 1
    %s23 = scalar_select %p22, 0, %s21
    %s24 = sadd.s32 1, %s15
    %s25 = scalar_select %p22, %s24, %s15
    %p26 = scmp.ge.s32.totalorder %s25, 2
    %s27 = scalar_select %p26, 0, %s25
    %s28 = ssub.s32 %s15, %s27
    %p29 = scmp.eq.s32.totalorder %s28, 0
    %s31 = sadd.s32 %s30, 1
    %s32 = scalar_select %p29, %s30, %s31
    %p35 = pneg %p29
    %p36 = scmp.eq.s32.totalorder %s8, 1
    %p37 = por %p35, %p36
    %p38 = scmp.ne.s32.totalorder %s30, %s33
    %p39 = scmp.eq.s32.totalorder %s8, 0
    %p40 = por %p38, %p39
    %p41 = scmp.ne.s32.totalorder %s30, %s33
    %p42 = scmp.eq.s32.totalorder %s13, 1
    %p43 = por %p41, %p42
    %p44 = scmp.ne.s32.totalorder %s33, %s34
    %p45 = scmp.eq.s32.totalorder %s13, 0
    %p46 = por %p44, %p45
    %p47 = scmp.ne.s32.totalorder %s33, %s34
    %p48 = scmp.eq.s32.totalorder %s14, 1
    %p49 = por %p47, %p48
    %p51 = scmp.ne.s32.totalorder %s34, %s50
    %p52 = scmp.eq.s32.totalorder %s14, 0
    %p53 = por %p51, %p52
    %s54 = ssub.s32 %s15, %s27
    %s55 = ssub.s32 %s16, %s23
    %s56 = sor.u32 %s54, %s55
    %p57 = scmp.eq.s32.totalorder %s56, 0
    %s59 = sadd.s32 %s58, 1
    %s60 = scalar_select %p57, %s58, %s59
    %p63 = pneg %p57
    %p64 = scmp.eq.s32.totalorder %s8, 1
    %p65 = por %p63, %p64
    %p66 = scmp.ne.s32.totalorder %s58, %s61
    %p67 = scmp.eq.s32.totalorder %s8, 0
    %p68 = por %p66, %p67
    %p69 = scmp.ne.s32.totalorder %s58, %s61
    %p70 = scmp.eq.s32.totalorder %s13, 1
    %p71 = por %p69, %p70
    %p72 = scmp.ne.s32.totalorder %s61, %s62
    %p73 = scmp.eq.s32.totalorder %s13, 0
    %p74 = por %p72, %p73
    %p75 = scmp.ne.s32.totalorder %s61, %s62
    %p76 = scmp.eq.s32.totalorder %s14, 1
    %p77 = por %p75, %p76
    %p79 = scmp.ne.s32.totalorder %s62, %s78
    %p80 = scmp.eq.s32.totalorder %s14, 0
    %p81 = por %p79, %p80
    %s82 = ssub.s32 %s15, %s27
    %s83 = ssub.s32 %s16, %s23
    %s84 = sor.u32 %s82, %s83
    %p85 = scmp.eq.s32.totalorder %s84, 0
    %s87 = sadd.s32 %s86, 1
    %s88 = scalar_select %p85, %s86, %s87
    %p91 = pneg %p85
    %p92 = scmp.eq.s32.totalorder %s8, 1
    %p93 = por %p91, %p92
    %p94 = scmp.ne.s32.totalorder %s86, %s89
    %p95 = scmp.eq.s32.totalorder %s8, 0
    %p96 = por %p94, %p95
    %p97 = scmp.ne.s32.totalorder %s86, %s89
    %p98 = scmp.eq.s32.totalorder %s13, 1
    %p99 = por %p97, %p98
    %p100 = scmp.ne.s32.totalorder %s89, %s90
    %p101 = scmp.eq.s32.totalorder %s13, 0
    %p102 = por %p100, %p101
    %p103 = scmp.ne.s32.totalorder %s89, %s90
    %p104 = scmp.eq.s32.totalorder %s14, 1
    %p105 = por %p103, %p104
    %p107 = scmp.ne.s32.totalorder %s90, %s106
    %p108 = scmp.eq.s32.totalorder %s14, 0
    %p109 = por %p107, %p108
    %p110 = scmp.le.s32.totalorder 1, %s8
    %p111 = scmp.lt.s32.totalorder %s8, 3
    %p112 = pnand %p110, %p111
    %p113 = pneg %p112
    // Predicated region
    $region9: #{dropout2d.1} parent=5 // pred_check
      _
    $region10: #{dropout2d.1} parent=5 // pred_check_branch
      %115 = sbr.rel (%p112) target = $region12
    $region11: #{dropout2d.1} parent=5 // pred_region
      %s116 = ssub.s32 %s8, 1
    $region12: #{dropout2d.1} parent=5 // pred_fallthru
      _
    %p117 = scmp.lt.s32.totalorder %s8, 2
    // Predicated region
    $region13: #{dropout2d.1} parent=5 // pred_check
      %p118 = pneg %p117
    $region14: #{dropout2d.1} parent=5 // pred_check_branch
      %120 = sbr.rel (%p118) target = $region16
    $region15: #{dropout2d.1} parent=5 // pred_region
      // Predicated region
      $region17: #{dropout2d.1} parent=15 // pred_check
        %p121 = pneg %p40
      $region18: #{dropout2d.1} parent=15 // pred_check_branch
        %123 = sbr.rel (%p121) target = $region20
      $region19: #{dropout2d.1} parent=15 // pred_region
        %p124 = scmp.lt.s32.totalorder %s15, 1
        %s125 = scalar_select %p124, %s15, 1
        %s126 = scalar_lea.vmem %s0, %s125
      $region20: #{dropout2d.1} parent=15 // pred_fallthru
        _
      // Predicated region
      $region21: #{dropout2d.1} parent=15 // pred_check
        %p127 = pneg %p68
      $region22: #{dropout2d.1} parent=15 // pred_check_branch
        %129 = sbr.rel (%p127) target = $region24
      $region23: #{dropout2d.1} parent=15 // pred_region
        %s130 = smul.u32 2, %s16
        %p131 = scmp.lt.s32.totalorder %s15, 1
        %s132 = scalar_select %p131, %s15, 1
        %p133 = scmp.lt.s32.totalorder %s130, 1
        %s134 = scalar_select %p133, %s130, 1
        %s135 = smul.addr %s132, 2
        %s136 = sadd.s32 %s134, %s135
        %s137 = smul.addr %s136, 8
        %s138 = scalar_lea.vmem %s1, %s137
        %s139 = smul.u32 2, %s16
      $region24: #{dropout2d.1} parent=15 // pred_fallthru
        _
    $region16: #{dropout2d.1} parent=5 // pred_fallthru
      _
    %p140 = scmp.le.s32.totalorder 1, %s8
    %p141 = scmp.lt.s32.totalorder %s8, 3
    %p142 = pnand %p140, %p141
    %p143 = pneg %p142
    // Predicated region
    $region25: #{dropout2d.1} parent=5 // pred_check
      _
    $region26: #{dropout2d.1} parent=5 // pred_check_branch
      %145 = sbr.rel (%p142) target = $region28
    $region27: #{dropout2d.1} parent=5 // pred_region
      %s146 = ssub.s32 %s8, 1
      %p147 = scmp.lt.s32.totalorder %s17, 1
      %s148 = scalar_select %p147, %s17, 1
      %s149 = scalar_lea.vmem %s0, %s148
      %p150 = pneg %p46
      %p151 = pneg %p43
      %s152 = smul.u32 2, %s18
      %p153 = scmp.lt.s32.totalorder %s17, 1
      %s154 = scalar_select %p153, %s17, 1
      %p155 = scmp.lt.s32.totalorder %s152, 1
      %s156 = scalar_select %p155, %s152, 1
      %s157 = smul.addr %s154, 2
      %s158 = sadd.s32 %s156, %s157
      %s159 = smul.addr %s158, 8
      %s160 = scalar_lea.vmem %s1, %s159
      %p161 = pneg %p74
      %p162 = pneg %p71
      %p163 = pneg %p102
      %p164 = pneg %p99
      %s165 = smul.u32 2, %s18
      %p166 = scmp.lt.s32.totalorder %s17, 1
      %s167 = scalar_select %p166, %s17, 1
      %p168 = scmp.lt.s32.totalorder %s165, 1
      %s169 = scalar_select %p168, %s165, 1
      %s170 = smul.addr %s167, 2
      %s171 = sadd.s32 %s169, %s170
      %s172 = smul.addr %s171, 8
      %s173 = scalar_lea.vmem %s2, %s172
      %p174 = scmp.lt.s32.totalorder %s17, 1
      %s175 = scalar_select %p174, %s17, 1
      %s176 = scalar_lea.vmem %s0, %s175
      %s177 = smul.u32 2, %s18
      %p178 = scmp.lt.s32.totalorder %s17, 1
      %s179 = scalar_select %p178, %s17, 1
      %p180 = scmp.lt.s32.totalorder %s177, 1
      %s181 = scalar_select %p180, %s177, 1
      %s182 = smul.addr %s179, 2
      %s183 = sadd.s32 %s181, %s182
      %s184 = smul.addr %s183, 8
      %s185 = scalar_lea.vmem %s1, %s184
      %s186 = smul.u32 2, %s18
      %s187 = smul.u32 2, %s18
      %p188 = scmp.lt.s32.totalorder %s17, 1
      %s189 = scalar_select %p188, %s17, 1
      %p190 = scmp.lt.s32.totalorder %s187, 1
      %s191 = scalar_select %p190, %s187, 1
      %s192 = smul.addr %s189, 2
      %s193 = sadd.s32 %s191, %s192
      %s194 = smul.addr %s193, 8
      %s195 = scalar_lea.vmem %s2, %s194
      %s196 = smul.u32 2, %s18
      %v197 = vld [vmem:[%s185] sm:$0xff]
      %v198 = vld [vmem:[%s185 + $0x8] sm:$0xff]
      %v199 = vld [vmem:[%s176] sm:$0x1]
      %v201 = vlaneseq
      %v202 = vshrl.u32 %v201, 7
      %v203 = vsub.s32 0, %v202
      %v204 = vrot.slane %v199, %v203
      %v206 = vmul.f32 %v197, %v204
      %v207 = vmul.f32 %v198, %v204
      %208 = vst [vmem:[%s195] sm:$0xff] %v206
      %209 = vst [vmem:[%s195 + $0x8] sm:$0xff] %v207
      %s210 = smul.u32 2, %s18
      %p211 = scmp.lt.s32.totalorder %s17, 1
      %s212 = scalar_select %p211, %s17, 1
      %p213 = scmp.lt.s32.totalorder %s210, 1
      %s214 = scalar_select %p213, %s210, 1
      %s215 = smul.addr %s212, 2
      %s216 = sadd.s32 %s214, %s215
      %s217 = smul.addr %s216, 8
      %s218 = scalar_lea.vmem %s2, %s217
      // Predicated region
      $region29: #{dropout2d.1} parent=27 // pred_check
        %p219 = pneg %p99
      $region30: #{dropout2d.1} parent=27 // pred_check_branch
        %221 = sbr.rel (%p219) target = $region32
      $region31: #{dropout2d.1} parent=27 // pred_region
        %s222 = smul.u32 2, %s18
      $region32: #{dropout2d.1} parent=27 // pred_fallthru
        _
    $region28: #{dropout2d.1} parent=5 // pred_fallthru
      _
    %p223 = scmp.le.s32.totalorder 2, %s8
    // Predicated region
    $region33: #{dropout2d.1} parent=5 // pred_check
      %p224 = pneg %p223
    $region34: #{dropout2d.1} parent=5 // pred_check_branch
      %226 = sbr.rel (%p224) target = $region36
    $region35: #{dropout2d.1} parent=5 // pred_region
      %s227 = ssub.s32 %s8, 2
      // Predicated region
      $region37: #{dropout2d.1} parent=35 // pred_check
        %p228 = pneg %p105
      $region38: #{dropout2d.1} parent=35 // pred_check_branch
        %230 = sbr.rel (%p228) target = $region40
      $region39: #{dropout2d.1} parent=35 // pred_region
        %s231 = smul.u32 2, %s20
        %p232 = scmp.lt.s32.totalorder %s19, 1
        %s233 = scalar_select %p232, %s19, 1
        %p234 = scmp.lt.s32.totalorder %s231, 1
        %s235 = scalar_select %p234, %s231, 1
        %s236 = smul.addr %s233, 2
        %s237 = sadd.s32 %s235, %s236
        %s238 = smul.addr %s237, 8
        %s239 = scalar_lea.vmem %s2, %s238
      $region40: #{dropout2d.1} parent=35 // pred_fallthru
        _
    $region36: #{dropout2d.1} parent=5 // pred_fallthru
      _
  $region6: #{dropout2d.1} parent=0 // loop_footer
    %s12 = sadd.s32 1, %s8
  $region7: #{dropout2d.1} parent=0 // loop_footer_branch
    %7 = sbr.rel target = $region3
  $region8: #{dropout2d.1} parent=0 // loop_exit
    _

</llo_original>
